<compile_context>
chip_gen: v5e
topology: v5e:2x2
jax: 0.10.0
libtpu: 0.0.40
codegen_flags: <defaults>
</compile_context>

<pallas_src>
import jax
import jax.numpy as jnp
from jax.experimental import pallas as pl
from jax.experimental.pallas import tpu as pltpu

_MIB = 1024 * 1024


def _round_up(x, m):
    return (x + m - 1) // m * m


def _vmem_capacity_bytes():
    try:
        info = pltpu.get_tpu_info()
        return int(getattr(info, "vmem_capacity_bytes", 64 * _MIB))
    except Exception:
        return 64 * _MIB  # conservative (v7x-sized) fallback


def _vmem_estimate(tq, lp, hp, pp, p_bytes):
    """Rough per-grid-step VMEM residency, including double-buffered pipeline slots."""
    db = 2  # default pipeline double-buffering
    full_keys = db * (hp * lp * 2 + lp * pp * 2 + lp * 4)            # K^T, params-bf16, q_row
    q_tiles = db * (tq * hp * 2 + tq * pp * p_bytes + 2 * tq * 4)    # q_scaled, p_orig, qcol+rep
    out_tile = db * (tq * pp * p_bytes)
    scratch = 4 * tq * lp * 4 + tq * pp * 4                          # scores/mask/exp/attn + smoothed
    return full_keys + q_tiles + out_tile + scratch


def _pick_tiling(lp, hp, pp, p_bytes, tq=None):
    """Generation/VMEM-aware query-tile size and vmem limit."""
    cap = _vmem_capacity_bytes()
    base_limit = 96 * _MIB if cap >= 128 * _MIB else 40 * _MIB       # v5e/v6e vs v7x
    budget = int(base_limit * 0.85)
    if tq is None:
        cands = [c for c in (1024, 512, 256, 128) if lp % c == 0]
        if lp <= 1024:
            cands.append(lp)
        cands = sorted(set(cands), reverse=True)
        tq = cands[-1]
        for c in cands:
            if _vmem_estimate(c, lp, hp, pp, p_bytes) <= budget:
                tq = c
                break
    est = _vmem_estimate(tq, lp, hp, pp, p_bytes)
    limit = base_limit
    if est > budget:
        # Very large L*H*P: grow the limit (keep headroom for compiler scratch) rather
        # than failing outright.  TODO(synk): key-tiled online-softmax for this regime.
        limit = min(cap - 8 * _MIB, max(base_limit, est + 8 * _MIB))
    return tq, int(limit)


def _smoothing_kernel(qs_ref, kt_ref, pb_ref, po_ref, qcol_ref, qrow_ref, rep_ref, out_ref):
    # qs_ref:   (TQ, Hp) bf16  temperature-scaled Q, query tile
    # kt_ref:   (Hp, Lp) bf16  K^T, all keys (pre-transposed: no in-kernel vxpose)
    # pb_ref:   (Lp, Pp) bf16  params, all keys (matmul operand)
    # po_ref:   (TQ, Pp)       params, query tile, original dtype (bit-exact passthrough)
    # qcol_ref: (TQ, 1) i32 | qrow_ref: (1, Lp) i32 | rep_ref: (TQ, 1) i32
    # scores[i, j] = (Q_i / temp_i) . K_j   (bf16 MXU operands, f32 accumulation)
    scores = jnp.dot(qs_ref[...], kt_ref[...],
                     preferred_element_type=jnp.float32)                       # (TQ, Lp)

    # softmax restricted to keys of the same question type
    same = qcol_ref[...] == qrow_ref[...]                                      # (TQ, Lp)
    s = jnp.where(same, scores, jnp.float32(-1e30))
    s_max = jnp.max(s, axis=-1, keepdims=True)
    e = jnp.exp(s - s_max)
    # approx reciprocal (EUP slot): rows normalized to ~1e-3 rel — fine for smoothing
    attn = e * pl.reciprocal(jnp.sum(e, axis=-1, keepdims=True), approx=True)  # (TQ, Lp)

    # smoothed_i = sum_j attn[i, j] * params_j   (bf16 MXU, f32 accumulation)
    smoothed = jnp.dot(attn.astype(jnp.bfloat16), pb_ref[...],
                       preferred_element_type=jnp.float32)                     # (TQ, Pp)

    # keep original rows (bit-exact) unless mask==1 and the type has >1 member
    replace = rep_ref[...] == 1                                                # (TQ, 1)
    out_ref[...] = jnp.where(replace, smoothed.astype(out_ref.dtype), po_ref[...])


def similarity_smoothing(hidden_states, param_states, questions, mask,
                         w_q, w_k, w_temp, *, num_question_types=None, tq=None):
    """hidden_states [B,L,H], param_states [B,L,P], questions [B,L] int, mask [B,L].
    w_q, w_k: (H, H) PyTorch-Linear weights (y = x @ W^T); w_temp: (1, H)."""
    B, L, H = hidden_states.shape
    P = param_states.shape[-1]

    Hp = _round_up(H, 128)            # lane-aligned hidden dim
    Pp = _round_up(P, 128)            # lane-dense output stores
    Lp = _round_up(L, 128)            # 128-multiple ⇒ a 128-wide query tile always divides

    p_bytes = jnp.dtype(param_states.dtype).itemsize
    TQ, vmem_limit = _pick_tiling(Lp, Hp, Pp, p_bytes, tq=tq)
    NQT = Lp // TQ

    f32, bf16 = jnp.float32, jnp.bfloat16

    # ---- padded weights (PyTorch Linear: y = x @ W^T) ----
    wqT = jnp.zeros((Hp, Hp), f32).at[:H, :H].set(jnp.asarray(w_q, f32).T).astype(bf16)
    wkT = jnp.zeros((Hp, Hp), f32).at[:H, :H].set(jnp.asarray(w_k, f32).T).astype(bf16)
    wtT = jnp.zeros((Hp, 1), f32).at[:H, :].set(jnp.asarray(w_temp, f32).T).astype(bf16)

    # ---- hoisted projections: ONE batched XLA matmul each (not once per query tile) ----
    hb = jnp.zeros((B, Lp, Hp), bf16).at[:, :L, :H].set(hidden_states.astype(bf16))
    Q = jnp.einsum('blh,hk->blk', hb, wqT, preferred_element_type=f32)        # (B, Lp, Hp)
    K = jnp.einsum('blh,hk->blk', hb, wkT, preferred_element_type=f32)        # (B, Lp, Hp)
    tlogit = jnp.einsum('blh,hk->blk', hb, wtT, preferred_element_type=f32)   # (B, Lp, 1)
    temps = jax.nn.softplus(tlogit) + 0.01
    q_scaled = (Q / temps).astype(bf16)                 # temperature folded into Q
    kT = jnp.swapaxes(K.astype(bf16), 1, 2)             # (B, Hp, Lp) pre-transposed for QK^T

    # ---- params: bf16 full-sequence matmul copy + original-dtype passthrough tiles ----
    p_pad = jnp.zeros((B, Lp, Pp), param_states.dtype).at[:, :L, :P].set(param_states)
    p_bf = p_pad.astype(bf16)

    # ---- question ids: padded rows get a sentinel strictly below every real id ----
    q_i32 = questions.astype(jnp.int32)
    sentinel = jnp.min(q_i32) - 1
    q_pad = jnp.full((B, Lp), sentinel, jnp.int32).at[:, :L].set(q_i32)
    q_col = q_pad.reshape(B, Lp, 1)
    q_row = q_pad.reshape(B, 1, Lp)

    # ---- replace decision: mask==1 AND the question type has >1 member ----
    if num_question_types is not None:
        # linear-time per-type count (ids outside [0, num_question_types) never replaced)
        tids = jnp.arange(num_question_types, dtype=jnp.int32)
        per_type = jnp.sum(q_i32[:, :, None] == tids[None, None, :], axis=1,
                           dtype=jnp.int32)                                   # (B, T)
        valid = (q_i32 >= 0) & (q_i32 < num_question_types)
        count = jnp.take_along_axis(
            per_type, jnp.clip(q_i32, 0, num_question_types - 1), axis=1)
        count = jnp.where(valid, count, 0)
    else:
        count = jnp.sum(q_i32[:, :, None] == q_i32[:, None, :], axis=-1)      # O(L^2) fallback
    rep = ((mask.astype(jnp.int32) == 1) & (count > 1)).astype(jnp.int32)
    rep = jnp.zeros((B, Lp), jnp.int32).at[:, :L].set(rep).reshape(B, Lp, 1)

    out = pl.pallas_call(
        _smoothing_kernel,
        out_shape=jax.ShapeDtypeStruct((B, Lp, Pp), param_states.dtype),
        grid=(B, NQT),
        in_specs=[
            pl.BlockSpec((None, TQ, Hp), lambda b, t: (b, t, 0)),   # scaled Q (query tile)
            pl.BlockSpec((None, Hp, Lp), lambda b, t: (b, 0, 0)),   # K^T (all keys, per batch)
            pl.BlockSpec((None, Lp, Pp), lambda b, t: (b, 0, 0)),   # params bf16 (all keys)
            pl.BlockSpec((None, TQ, Pp), lambda b, t: (b, t, 0)),   # params orig (query tile)
            pl.BlockSpec((None, TQ, 1), lambda b, t: (b, t, 0)),    # question ids (query tile)
            pl.BlockSpec((None, 1, Lp), lambda b, t: (b, 0, 0)),    # question ids (all keys)
            pl.BlockSpec((None, TQ, 1), lambda b, t: (b, t, 0)),    # replace flags (query tile)
        ],
        out_specs=pl.BlockSpec((None, TQ, Pp), lambda b, t: (b, t, 0)),
        compiler_params=pltpu.CompilerParams(
            dimension_semantics=("parallel", "parallel"),
            vmem_limit_bytes=vmem_limit),
    )(q_scaled, kT, p_bf, p_pad, q_col, q_row, rep)

    return hidden_states, out[:, :L, :P]


# ----------------------------- references (for the self-test) -----------------------------

def _reference_exact(hidden, params, questions, mask, w_q, w_k, w_temp):
    """Pure-JAX f32 reference mirroring the PyTorch loops (eval mode)."""
    Q = hidden @ w_q.T
    K = hidden @ w_k.T
    temps = jax.nn.softplus(hidden @ w_temp.T) + 0.01
    scores = jnp.einsum('blh,bmh->blm', Q, K) / temps
    same = questions[:, :, None] == questions[:, None, :]
    attn = jax.nn.softmax(jnp.where(same, scores, -1e30), axis=-1)
    smoothed = jnp.einsum('blm,bmp->blp', attn, params)
    count = jnp.sum(same, axis=-1)
    replace = (mask == 1) & (count > 1)
    return hidden, jnp.where(replace[..., None], smoothed, params)


def _reference_mixed(hidden, params, questions, mask, w_q, w_k, w_temp):
    """Same semantics with the kernel's bf16-operand / f32-accumulate precision."""
    hb = hidden.astype(jnp.bfloat16)
    wq = jnp.asarray(w_q).astype(jnp.bfloat16).T
    wk = jnp.asarray(w_k).astype(jnp.bfloat16).T
    wt = jnp.asarray(w_temp).astype(jnp.bfloat16).T
    Q = jnp.einsum('blh,hk->blk', hb, wq, preferred_element_type=jnp.float32)
    K = jnp.einsum('blh,hk->blk', hb, wk,
                   preferred_element_type=jnp.float32).astype(jnp.bfloat16)
    t = jnp.einsum('blh,hk->blk', hb, wt, preferred_element_type=jnp.float32)
    temps = jax.nn.softplus(t) + 0.01
    qs = (Q / temps).astype(jnp.bfloat16)
    scores = jnp.einsum('blh,bmh->blm', qs, K, preferred_element_type=jnp.float32)
    same = questions[:, :, None] == questions[:, None, :]
    attn = jax.nn.softmax(jnp.where(same, scores, -1e30), axis=-1)
    smoothed = jnp.einsum('blm,bmp->blp', attn.astype(jnp.bfloat16),
                          params.astype(jnp.bfloat16),
                          preferred_element_type=jnp.float32)
    count = jnp.sum(same, axis=-1)
    replace = (mask == 1) & (count > 1)
    return hidden, jnp.where(replace[..., None], smoothed.astype(params.dtype), params)


if __name__ == "__main__":
    B, L, H, P = 2, 8, 32, 16
    num_question_types = 3

    key = jax.random.PRNGKey(0)
    k_h, k_p, k_q, k_m, k_wq, k_wt = jax.random.split(key, 6)

    hidden = jax.random.normal(k_h, (B, L, H), dtype=jnp.float32)
    params = jax.random.normal(k_p, (B, L, P), dtype=jnp.float32)
    questions = jax.random.randint(k_q, (B, L), 0, num_question_types, dtype=jnp.int32)
    mask = jax.random.bernoulli(k_m, 0.5, (B, L)).astype(jnp.int32)

    # deterministic parameter init matching the module's __init__
    w_q = jnp.eye(H, dtype=jnp.float32) + 0.01 * jax.random.normal(k_wq, (H, H), jnp.float32)
    w_k = w_q                                   # K.weight copied from Q.weight
    w_temp = 0.01 * jax.random.normal(k_wt, (1, H), jnp.float32)

    h_out, p_out = similarity_smoothing(hidden, params, questions, mask, w_q, w_k, w_temp,
                                        num_question_types=num_question_types)
    jax.block_until_ready(p_out)

    _, p_ref_mixed = _reference_mixed(hidden, params, questions, mask, w_q, w_k, w_temp)
    _, p_ref_exact = _reference_exact(hidden, params, questions, mask, w_q, w_k, w_temp)

    assert jnp.array_equal(h_out, hidden)                       # hidden passes through unchanged
    assert jnp.allclose(p_out, p_ref_mixed, atol=2e-2, rtol=2e-2)   # matched-precision check
    assert jnp.allclose(p_out, p_ref_exact, atol=2.5e-1, rtol=2.5e-1)  # semantics vs f32 spec

    print("KERNEL_OK")
</pallas_src>

<mosaic_0001>
module attributes {stable_mosaic.version = 11 : i64} {
  func.func @_smoothing_kernel(%arg0: i32, %arg1: i32, %arg2: memref<1x128x128xbf16, #tpu.memory_space<vmem>>, %arg3: memref<1x128x128xbf16, #tpu.memory_space<vmem>>, %arg4: memref<1x128x128xbf16, #tpu.memory_space<vmem>>, %arg5: memref<1x128x128xf32, #tpu.memory_space<vmem>>, %arg6: memref<1x128x1xi32, #tpu.memory_space<vmem>>, %arg7: memref<1x1x128xi32, #tpu.memory_space<vmem>>, %arg8: memref<1x128x1xi32, #tpu.memory_space<vmem>>, %arg9: memref<1x128x128xf32, #tpu.memory_space<vmem>>) attributes {dimension_semantics = [#tpu.dimension_semantics<parallel>, #tpu.dimension_semantics<parallel>], iteration_bounds = array<i64: 2, 1>, scalar_prefetch = 0 : i64, scratch_operands = 0 : i64, tpu.core_type = #tpu.core_type<tc>, window_params = [{transform_indices = @transform_0, window_bounds = array<i64: 1, 128, 128>}, {transform_indices = @transform_1, window_bounds = array<i64: 1, 128, 128>}, {transform_indices = @transform_2, window_bounds = array<i64: 1, 128, 128>}, {transform_indices = @transform_3, window_bounds = array<i64: 1, 128, 128>}, {transform_indices = @transform_4, window_bounds = array<i64: 1, 128, 1>}, {transform_indices = @transform_5, window_bounds = array<i64: 1, 1, 128>}, {transform_indices = @transform_6, window_bounds = array<i64: 1, 128, 1>}, {transform_indices = @transform_7, window_bounds = array<i64: 1, 128, 128>}]} {
    %c0 = arith.constant 0 : index
    %c0_0 = arith.constant 0 : index
    %c0_1 = arith.constant 0 : index
    %0 = vector.load %arg2[%c0, %c0_0, %c0_1] : memref<1x128x128xbf16, #tpu.memory_space<vmem>>, vector<1x128x128xbf16>
    %1 = vector.shape_cast %0 : vector<1x128x128xbf16> to vector<128x128xbf16>
    %c0_2 = arith.constant 0 : index
    %c0_3 = arith.constant 0 : index
    %c0_4 = arith.constant 0 : index
    %2 = vector.load %arg3[%c0_2, %c0_3, %c0_4] : memref<1x128x128xbf16, #tpu.memory_space<vmem>>, vector<1x128x128xbf16>
    %3 = vector.shape_cast %2 : vector<1x128x128xbf16> to vector<128x128xbf16>
    %cst = arith.constant dense<0.000000e+00> : vector<128x128xf32>
    %4 = tpu.matmul %1, %3, %cst {dimension_numbers = #tpu.dot_dimension_numbers<[1], [0], [0], [1], [0, 0, 1, 1], [], []>} : vector<128x128xbf16>, vector<128x128xbf16>, vector<128x128xf32> -> vector<128x128xf32>
    %c0_5 = arith.constant 0 : index
    %c0_6 = arith.constant 0 : index
    %c0_7 = arith.constant 0 : index
    %5 = vector.load %arg6[%c0_5, %c0_6, %c0_7] : memref<1x128x1xi32, #tpu.memory_space<vmem>>, vector<1x128x1xi32>
    %6 = vector.shape_cast %5 : vector<1x128x1xi32> to vector<128x1xi32>
    %c0_8 = arith.constant 0 : index
    %c0_9 = arith.constant 0 : index
    %c0_10 = arith.constant 0 : index
    %7 = vector.load %arg7[%c0_8, %c0_9, %c0_10] : memref<1x1x128xi32, #tpu.memory_space<vmem>>, vector<1x1x128xi32>
    %8 = vector.shape_cast %7 : vector<1x1x128xi32> to vector<1x128xi32>
    %9 = vector.broadcast %6 : vector<128x1xi32> to vector<128x128xi32>
    %10 = vector.broadcast %8 : vector<1x128xi32> to vector<128x128xi32>
    %11 = arith.cmpi eq, %9, %10 : vector<128x128xi32>
    %cst_11 = arith.constant -1.000000e+30 : f32
    %12 = vector.broadcast %cst_11 : f32 to vector<128x128xf32>
    %13 = arith.select %11, %4, %12 : vector<128x128xi1>, vector<128x128xf32>
    %cst_12 = arith.constant dense<0xFF800000> : vector<128xf32>
    %14 = vector.multi_reduction <maximumf>, %13, %cst_12 [1] : vector<128x128xf32> to vector<128xf32>
    %15 = vector.shape_cast %14 : vector<128xf32> to vector<128x1xf32>
    %16 = vector.broadcast %15 : vector<128x1xf32> to vector<128x128xf32>
    %17 = arith.subf %13, %16 : vector<128x128xf32>
    %18 = math.exp %17 : vector<128x128xf32>
    %cst_13 = arith.constant dense<0.000000e+00> : vector<128xf32>
    %19 = vector.multi_reduction <add>, %18, %cst_13 [1] : vector<128x128xf32> to vector<128xf32>
    %20 = vector.shape_cast %19 : vector<128xf32> to vector<128x1xf32>
    %21 = tpu.reciprocal %20 {approx = true} : vector<128x1xf32> -> vector<128x1xf32>
    %22 = vector.broadcast %21 : vector<128x1xf32> to vector<128x128xf32>
    %23 = arith.mulf %18, %22 : vector<128x128xf32>
    %24 = arith.truncf %23 : vector<128x128xf32> to vector<128x128xbf16>
    %c0_14 = arith.constant 0 : index
    %c0_15 = arith.constant 0 : index
    %c0_16 = arith.constant 0 : index
    %25 = vector.load %arg4[%c0_14, %c0_15, %c0_16] : memref<1x128x128xbf16, #tpu.memory_space<vmem>>, vector<1x128x128xbf16>
    %26 = vector.shape_cast %25 : vector<1x128x128xbf16> to vector<128x128xbf16>
    %cst_17 = arith.constant dense<0.000000e+00> : vector<128x128xf32>
    %27 = tpu.matmul %24, %26, %cst_17 {dimension_numbers = #tpu.dot_dimension_numbers<[1], [0], [0], [1], [0, 0, 1, 1], [], []>} : vector<128x128xbf16>, vector<128x128xbf16>, vector<128x128xf32> -> vector<128x128xf32>
    %c0_18 = arith.constant 0 : index
    %c0_19 = arith.constant 0 : index
    %c0_20 = arith.constant 0 : index
    %28 = vector.load %arg8[%c0_18, %c0_19, %c0_20] : memref<1x128x1xi32, #tpu.memory_space<vmem>>, vector<1x128x1xi32>
    %29 = vector.shape_cast %28 : vector<1x128x1xi32> to vector<128x1xi32>
    %c1_i32 = arith.constant 1 : i32
    %30 = vector.broadcast %c1_i32 : i32 to vector<128x1xi32>
    %31 = arith.cmpi eq, %29, %30 : vector<128x1xi32>
    %c0_21 = arith.constant 0 : index
    %c0_22 = arith.constant 0 : index
    %c0_23 = arith.constant 0 : index
    %32 = vector.load %arg5[%c0_21, %c0_22, %c0_23] : memref<1x128x128xf32, #tpu.memory_space<vmem>>, vector<1x128x128xf32>
    %33 = vector.shape_cast %32 : vector<1x128x128xf32> to vector<128x128xf32>
    %34 = vector.shape_cast %31 : vector<128x1xi1> to vector<128x1xi1>
    %35 = vector.broadcast %34 : vector<128x1xi1> to vector<128x128xi1>
    %36 = arith.select %35, %27, %33 : vector<128x128xi1>, vector<128x128xf32>
    %c0_24 = arith.constant 0 : index
    %c0_25 = arith.constant 0 : index
    %c0_26 = arith.constant 0 : index
    %37 = vector.load %arg9[%c0_24, %c0_25, %c0_26] : memref<1x128x128xf32, #tpu.memory_space<vmem>>, vector<1x128x128xf32>
    %38 = vector.shape_cast %37 : vector<1x128x128xf32> to vector<128x128xf32>
    %39 = vector.shape_cast %36 : vector<128x128xf32> to vector<1x128x128xf32>
    tpu.vector_store %arg9[%c0_24, %c0_25, %c0_26], %39 {strides = array<i32>} : memref<1x128x128xf32, #tpu.memory_space<vmem>>, vector<1x128x128xf32>,
    return
  }
  func.func @transform_0(%arg0: i32, %arg1: i32) -> (i32, i32, i32) {
    %c0_i32 = arith.constant 0 : i32
    %c0_i32_0 = arith.constant 0 : i32
    return %arg0, %arg1, %c0_i32 : i32, i32, i32
  }
  func.func @transform_1(%arg0: i32, %arg1: i32) -> (i32, i32, i32) {
    %c0_i32 = arith.constant 0 : i32
    %c0_i32_0 = arith.constant 0 : i32
    %c0_i32_1 = arith.constant 0 : i32
    return %arg0, %c0_i32, %c0_i32_0 : i32, i32, i32
  }
  func.func @transform_2(%arg0: i32, %arg1: i32) -> (i32, i32, i32) {
    %c0_i32 = arith.constant 0 : i32
    %c0_i32_0 = arith.constant 0 : i32
    %c0_i32_1 = arith.constant 0 : i32
    return %arg0, %c0_i32, %c0_i32_0 : i32, i32, i32
  }
  func.func @transform_3(%arg0: i32, %arg1: i32) -> (i32, i32, i32) {
    %c0_i32 = arith.constant 0 : i32
    %c0_i32_0 = arith.constant 0 : i32
    return %arg0, %arg1, %c0_i32 : i32, i32, i32
  }
  func.func @transform_4(%arg0: i32, %arg1: i32) -> (i32, i32, i32) {
    %c0_i32 = arith.constant 0 : i32
    %c0_i32_0 = arith.constant 0 : i32
    return %arg0, %arg1, %c0_i32 : i32, i32, i32
  }
  func.func @transform_5(%arg0: i32, %arg1: i32) -> (i32, i32, i32) {
    %c0_i32 = arith.constant 0 : i32
    %c0_i32_0 = arith.constant 0 : i32
    %c0_i32_1 = arith.constant 0 : i32
    return %arg0, %c0_i32, %c0_i32_0 : i32, i32, i32
  }
  func.func @transform_6(%arg0: i32, %arg1: i32) -> (i32, i32, i32) {
    %c0_i32 = arith.constant 0 : i32
    %c0_i32_0 = arith.constant 0 : i32
    return %arg0, %arg1, %c0_i32 : i32, i32, i32
  }
  func.func @transform_7(%arg0: i32, %arg1: i32) -> (i32, i32, i32) {
    %c0_i32 = arith.constant 0 : i32
    %c0_i32_0 = arith.constant 0 : i32
    return %arg0, %arg1, %c0_i32 : i32, i32, i32
  }
}

</mosaic_0001>

<llo_original>
// kernel: tpu_custom_call.1
$region0: #{tpu_custom_call.1}
  #allocation0 [shape = 'u32[]', space=smem, size = 0x4, offset = 0x4, fixed_abs, tag = 'smem constant byte address 0x4 - core index']
  #allocation1 [shape = 'u32[72,128]{1,0:T(1,128)}', space=vmem, size = 0x9000, scoped, tag = 'internal scratch']
  %s0 = inlined_call_operand.vmem [shape: bf16[2,128,128], index: 0, kind: input, shape index: {}]
  %s1 = inlined_call_operand.vmem [shape: bf16[2,128,128], index: 1, kind: input, shape index: {}]
  %s2 = inlined_call_operand.hbm [shape: bf16[2,128,128], index: 2, kind: input, shape index: {}]
  %s3 = inlined_call_operand.vmem [shape: f32[2,128,128], index: 3, kind: input, shape index: {}]
  %s4 = inlined_call_operand.vmem [shape: s32[2,128,1], index: 4, kind: input, shape index: {}]
  %s5 = inlined_call_operand.vmem [shape: s32[2,1,128], index: 5, kind: input, shape index: {}]
  %s6 = inlined_call_operand.vmem [shape: s32[2,128,1], index: 6, kind: input, shape index: {}]
  %s7 = inlined_call_operand.hbm [shape: f32[2,128,128], index: 7, kind: output, shape index: {}]
  %s8 = sld [smem:[#allocation0]]
  $region65: #{tpu_custom_call.1} parent=0
    _
  %s10 = ssub.s32 1, %s8
  %s11 = scalar_select 0, %s10, %s8
  $region1: #{tpu_custom_call.1} parent=0
    #allocation2 [shape = 'u8[65536]{0}', space=vmem, size = 0x10000, scoped, tag = 'input window, operand 2']
    #allocation3 [shape = 's32[2]{0}', space=sflag, size = 0x8, scoped, tag = 'scoped memory for tpu_custom_call.1']
    #allocation4 [shape = 's32[2]{0}', space=sflag, size = 0x8, scoped, tag = 'scoped memory for tpu_custom_call.1']
    #allocation5 [shape = 'u8[131072]{0}', space=vmem, size = 0x20000, scoped, tag = 'output window, operand 0']
    %12 = vsyncpa [#allocation3], 0
    %s13 = scalar_lea.sflag [#allocation3], 1
    %14 = vsyncpa %s13, 0
    %15 = vsyncpa [#allocation4], 0
    %s16 = scalar_lea.sflag [#allocation4], 1
    %17 = vsyncpa %s16, 0
    loop: start=0, step=1, limit=4
    $region2: #{tpu_custom_call.1} parent=1 // loop_pre_header
      _
    $region3: #{tpu_custom_call.1} parent=1 // loop_header
      %s19 = sphi 0, %s23
      %p20 = scmp.ge.s32.totalorder %s19, 4
      %s26 = sphi 0, %s38
      %s27 = sphi 0, %s34
      %s28 = sphi 0, %s26
      %s29 = sphi 0, %s27
      %s30 = sphi 0, %s28
      %s31 = sphi 0, %s29
      %s43 = sphi 0, %s45
      %s46 = sphi 0, %s43
      %s47 = sphi 0, %s46
      %s63 = sphi 0, %s47
      %s69 = sphi 0, %s71
      %s72 = sphi 0, %s69
      %s73 = sphi 0, %s72
      %s89 = sphi 0, %s73
      %s95 = sphi 0, %s97
      %s98 = sphi 0, %s95
      %s99 = sphi 0, %s98
      %s115 = sphi 0, %s99
      %s123 = sphi 0, %s125
      %s126 = sphi 0, %s123
      %s127 = sphi 0, %s126
      %s143 = sphi 0, %s127
      %s151 = sphi 0, %s153
      %s154 = sphi 0, %s151
      %s155 = sphi 0, %s154
      %s171 = sphi 0, %s155
      %s177 = sphi 0, %s179
      %s180 = sphi 0, %s177
      %s181 = sphi 0, %s180
      %s197 = sphi 0, %s181
      %s205 = sphi 0, %s207
      %s208 = sphi 0, %s205
      %s209 = sphi 0, %s208
      %s225 = sphi 0, %s209
      %s233 = sphi 0, %s235
      %s236 = sphi 0, %s233
      %s237 = sphi 0, %s236
      %s253 = sphi 0, %s237
    $region4: #{tpu_custom_call.1} parent=1 // loop_header_branch
      %22 = sbr.rel (%p20) target = $region8
    $region5: #{tpu_custom_call.1} parent=1 // loop_body
      %s24 = ssub.s32 %s19, 1
      %s25 = ssub.s32 %s19, 2
      %s32 = sadd.s32 1, %s27
      %p33 = scmp.ge.s32.totalorder %s32, 1
      %s34 = scalar_select %p33, 0, %s32
      %s35 = sadd.s32 1, %s26
      %s36 = scalar_select %p33, %s35, %s26
      %p37 = scmp.ge.s32.totalorder %s36, 2
      %s38 = scalar_select %p37, 0, %s36
      %s39 = ssub.s32 %s26, %s38
      %s40 = ssub.s32 %s27, %s34
      %s41 = sor.u32 %s39, %s40
      %p42 = scmp.eq.s32.totalorder %s41, 0
      %s44 = sadd.s32 %s43, 1
      %s45 = scalar_select %p42, %s43, %s44
      %p48 = pneg %p42
      %p49 = scmp.eq.s32.totalorder %s19, 1
      %p50 = por %p48, %p49
      %p51 = scmp.ne.s32.totalorder %s43, %s46
      %p52 = scmp.eq.s32.totalorder %s19, 0
      %p53 = por %p51, %p52
      %p54 = scmp.ne.s32.totalorder %s43, %s46
      %p55 = scmp.eq.s32.totalorder %s24, 1
      %p56 = por %p54, %p55
      %p57 = scmp.ne.s32.totalorder %s46, %s47
      %p58 = scmp.eq.s32.totalorder %s24, 0
      %p59 = por %p57, %p58
      %p60 = scmp.ne.s32.totalorder %s46, %s47
      %p61 = scmp.eq.s32.totalorder %s25, 1
      %p62 = por %p60, %p61
      %p64 = scmp.ne.s32.totalorder %s47, %s63
      %p65 = scmp.eq.s32.totalorder %s25, 0
      %p66 = por %p64, %p65
      %s67 = ssub.s32 %s26, %s38
      %p68 = scmp.eq.s32.totalorder %s67, 0
      %s70 = sadd.s32 %s69, 1
      %s71 = scalar_select %p68, %s69, %s70
      %p74 = pneg %p68
      %p75 = scmp.eq.s32.totalorder %s19, 1
      %p76 = por %p74, %p75
      %p77 = scmp.ne.s32.totalorder %s69, %s72
      %p78 = scmp.eq.s32.totalorder %s19, 0
      %p79 = por %p77, %p78
      %p80 = scmp.ne.s32.totalorder %s69, %s72
      %p81 = scmp.eq.s32.totalorder %s24, 1
      %p82 = por %p80, %p81
      %p83 = scmp.ne.s32.totalorder %s72, %s73
      %p84 = scmp.eq.s32.totalorder %s24, 0
      %p85 = por %p83, %p84
      %p86 = scmp.ne.s32.totalorder %s72, %s73
      %p87 = scmp.eq.s32.totalorder %s25, 1
      %p88 = por %p86, %p87
      %p90 = scmp.ne.s32.totalorder %s73, %s89
      %p91 = scmp.eq.s32.totalorder %s25, 0
      %p92 = por %p90, %p91
      %s93 = ssub.s32 %s26, %s38
      %p94 = scmp.eq.s32.totalorder %s93, 0
      %s96 = sadd.s32 %s95, 1
      %s97 = scalar_select %p94, %s95, %s96
      %p100 = pneg %p94
      %p101 = scmp.eq.s32.totalorder %s19, 1
      %p102 = por %p100, %p101
      %p103 = scmp.ne.s32.totalorder %s95, %s98
      %p104 = scmp.eq.s32.totalorder %s19, 0
      %p105 = por %p103, %p104
      %p106 = scmp.ne.s32.totalorder %s95, %s98
      %p107 = scmp.eq.s32.totalorder %s24, 1
      %p108 = por %p106, %p107
      %p109 = scmp.ne.s32.totalorder %s98, %s99
      %p110 = scmp.eq.s32.totalorder %s24, 0
      %p111 = por %p109, %p110
      %p112 = scmp.ne.s32.totalorder %s98, %s99
      %p113 = scmp.eq.s32.totalorder %s25, 1
      %p114 = por %p112, %p113
      %p116 = scmp.ne.s32.totalorder %s99, %s115
      %p117 = scmp.eq.s32.totalorder %s25, 0
      %p118 = por %p116, %p117
      %s119 = ssub.s32 %s26, %s38
      %s120 = ssub.s32 %s27, %s34
      %s121 = sor.u32 %s119, %s120
      %p122 = scmp.eq.s32.totalorder %s121, 0
      %s124 = sadd.s32 %s123, 1
      %s125 = scalar_select %p122, %s123, %s124
      %p128 = pneg %p122
      %p129 = scmp.eq.s32.totalorder %s19, 1
      %p130 = por %p128, %p129
      %p131 = scmp.ne.s32.totalorder %s123, %s126
      %p132 = scmp.eq.s32.totalorder %s19, 0
      %p133 = por %p131, %p132
      %p134 = scmp.ne.s32.totalorder %s123, %s126
      %p135 = scmp.eq.s32.totalorder %s24, 1
      %p136 = por %p134, %p135
      %p137 = scmp.ne.s32.totalorder %s126, %s127
      %p138 = scmp.eq.s32.totalorder %s24, 0
      %p139 = por %p137, %p138
      %p140 = scmp.ne.s32.totalorder %s126, %s127
      %p141 = scmp.eq.s32.totalorder %s25, 1
      %p142 = por %p140, %p141
      %p144 = scmp.ne.s32.totalorder %s127, %s143
      %p145 = scmp.eq.s32.totalorder %s25, 0
      %p146 = por %p144, %p145
      %s147 = ssub.s32 %s26, %s38
      %s148 = ssub.s32 %s27, %s34
      %s149 = sor.u32 %s147, %s148
      %p150 = scmp.eq.s32.totalorder %s149, 0
      %s152 = sadd.s32 %s151, 1
      %s153 = scalar_select %p150, %s151, %s152
      %p156 = pneg %p150
      %p157 = scmp.eq.s32.totalorder %s19, 1
      %p158 = por %p156, %p157
      %p159 = scmp.ne.s32.totalorder %s151, %s154
      %p160 = scmp.eq.s32.totalorder %s19, 0
      %p161 = por %p159, %p160
      %p162 = scmp.ne.s32.totalorder %s151, %s154
      %p163 = scmp.eq.s32.totalorder %s24, 1
      %p164 = por %p162, %p163
      %p165 = scmp.ne.s32.totalorder %s154, %s155
      %p166 = scmp.eq.s32.totalorder %s24, 0
      %p167 = por %p165, %p166
      %p168 = scmp.ne.s32.totalorder %s154, %s155
      %p169 = scmp.eq.s32.totalorder %s25, 1
      %p170 = por %p168, %p169
      %p172 = scmp.ne.s32.totalorder %s155, %s171
      %p173 = scmp.eq.s32.totalorder %s25, 0
      %p174 = por %p172, %p173
      %s175 = ssub.s32 %s26, %s38
      %p176 = scmp.eq.s32.totalorder %s175, 0
      %s178 = sadd.s32 %s177, 1
      %s179 = scalar_select %p176, %s177, %s178
      %p182 = pneg %p176
      %p183 = scmp.eq.s32.totalorder %s19, 1
      %p184 = por %p182, %p183
      %p185 = scmp.ne.s32.totalorder %s177, %s180
      %p186 = scmp.eq.s32.totalorder %s19, 0
      %p187 = por %p185, %p186
      %p188 = scmp.ne.s32.totalorder %s177, %s180
      %p189 = scmp.eq.s32.totalorder %s24, 1
      %p190 = por %p188, %p189
      %p191 = scmp.ne.s32.totalorder %s180, %s181
      %p192 = scmp.eq.s32.totalorder %s24, 0
      %p193 = por %p191, %p192
      %p194 = scmp.ne.s32.totalorder %s180, %s181
      %p195 = scmp.eq.s32.totalorder %s25, 1
      %p196 = por %p194, %p195
      %p198 = scmp.ne.s32.totalorder %s181, %s197
      %p199 = scmp.eq.s32.totalorder %s25, 0
      %p200 = por %p198, %p199
      %s201 = ssub.s32 %s26, %s38
      %s202 = ssub.s32 %s27, %s34
      %s203 = sor.u32 %s201, %s202
      %p204 = scmp.eq.s32.totalorder %s203, 0
      %s206 = sadd.s32 %s205, 1
      %s207 = scalar_select %p204, %s205, %s206
      %p210 = pneg %p204
      %p211 = scmp.eq.s32.totalorder %s19, 1
      %p212 = por %p210, %p211
      %p213 = scmp.ne.s32.totalorder %s205, %s208
      %p214 = scmp.eq.s32.totalorder %s19, 0
      %p215 = por %p213, %p214
      %p216 = scmp.ne.s32.totalorder %s205, %s208
      %p217 = scmp.eq.s32.totalorder %s24, 1
      %p218 = por %p216, %p217
      %p219 = scmp.ne.s32.totalorder %s208, %s209
      %p220 = scmp.eq.s32.totalorder %s24, 0
      %p221 = por %p219, %p220
      %p222 = scmp.ne.s32.totalorder %s208, %s209
      %p223 = scmp.eq.s32.totalorder %s25, 1
      %p224 = por %p222, %p223
      %p226 = scmp.ne.s32.totalorder %s209, %s225
      %p227 = scmp.eq.s32.totalorder %s25, 0
      %p228 = por %p226, %p227
      %s229 = ssub.s32 %s26, %s38
      %s230 = ssub.s32 %s27, %s34
      %s231 = sor.u32 %s229, %s230
      %p232 = scmp.eq.s32.totalorder %s231, 0
      %s234 = sadd.s32 %s233, 1
      %s235 = scalar_select %p232, %s233, %s234
      %p238 = pneg %p232
      %p239 = scmp.eq.s32.totalorder %s19, 1
      %p240 = por %p238, %p239
      %p241 = scmp.ne.s32.totalorder %s233, %s236
      %p242 = scmp.eq.s32.totalorder %s19, 0
      %p243 = por %p241, %p242
      %p244 = scmp.ne.s32.totalorder %s233, %s236
      %p245 = scmp.eq.s32.totalorder %s24, 1
      %p246 = por %p244, %p245
      %p247 = scmp.ne.s32.totalorder %s236, %s237
      %p248 = scmp.eq.s32.totalorder %s24, 0
      %p249 = por %p247, %p248
      %p250 = scmp.ne.s32.totalorder %s236, %s237
      %p251 = scmp.eq.s32.totalorder %s25, 1
      %p252 = por %p250, %p251
      %p254 = scmp.ne.s32.totalorder %s237, %s253
      %p255 = scmp.eq.s32.totalorder %s25, 0
      %p256 = por %p254, %p255
      %p257 = scmp.le.s32.totalorder 1, %s19
      %p258 = scmp.lt.s32.totalorder %s19, 3
      %p259 = pnand %p257, %p258
      %p260 = pneg %p259
      // Predicated region
      $region9: #{tpu_custom_call.1} parent=5 // pred_check
        _
      $region10: #{tpu_custom_call.1} parent=5 // pred_check_branch
        %262 = sbr.rel (%p259) target = $region12
      $region11: #{tpu_custom_call.1} parent=5 // pred_region
        %s263 = ssub.s32 %s19, 1
      $region12: #{tpu_custom_call.1} parent=5 // pred_fallthru
        _
      %p264 = scmp.lt.s32.totalorder %s19, 2
      // Predicated region
      $region13: #{tpu_custom_call.1} parent=5 // pred_check
        %p265 = pneg %p264
      $region14: #{tpu_custom_call.1} parent=5 // pred_check_branch
        %267 = sbr.rel (%p265) target = $region16
      $region15: #{tpu_custom_call.1} parent=5 // pred_region
        // Predicated region
        $region17: #{tpu_custom_call.1} parent=15 // pred_check
          %p268 = pneg %p53
        $region18: #{tpu_custom_call.1} parent=15 // pred_check_branch
          %270 = sbr.rel (%p268) target = $region20
        $region19: #{tpu_custom_call.1} parent=15 // pred_region
          %s271 = smul.u32 16, %s27
          %p272 = scmp.lt.s32.totalorder %s26, 1
          %s273 = scalar_select %p272, %s26, 1
          %p274 = scmp.lt.s32.totalorder %s271, 15
          %s275 = scalar_select %p274, %s271, 15
          %s276 = smul.addr %s273, 16
          %s277 = sadd.s32 %s275, %s276
          %s278 = smul.addr %s277, 4
          %s279 = scalar_lea.vmem %s0, %s278
          %s280 = smul.u32 16, %s27
        $region20: #{tpu_custom_call.1} parent=15 // pred_fallthru
          _
        // Predicated region
        $region21: #{tpu_custom_call.1} parent=15 // pred_check
          %p281 = pneg %p79
        $region22: #{tpu_custom_call.1} parent=15 // pred_check_branch
          %283 = sbr.rel (%p281) target = $region24
        $region23: #{tpu_custom_call.1} parent=15 // pred_region
          %p284 = scmp.lt.s32.totalorder %s26, 1
          %s285 = scalar_select %p284, %s26, 1
          %s286 = smul.addr %s285, 16
          %s287 = smul.addr %s286, 4
          %s288 = scalar_lea.vmem %s1, %s287
        $region24: #{tpu_custom_call.1} parent=15 // pred_fallthru
          _
        // Predicated region
        $region25: #{tpu_custom_call.1} parent=15 // pred_check
          %p289 = pneg %p105
        $region26: #{tpu_custom_call.1} parent=15 // pred_check_branch
          %291 = sbr.rel (%p289) target = $region28
        $region27: #{tpu_custom_call.1} parent=15 // pred_region
          %s292 = sand.u32 %s95, 1
          %s293 = scalar_lea.sflag [#allocation3], %s292
          %s294 = sand.u32 %s95, 1
          %s295 = smul.addr %s294, 64
          %s296 = scalar_lea.vmem [#allocation2], %s295
          %298 = vsyncadd %s293, 0
          %s299 = smul.addr %s26, 16
          %s300 = smul.addr %s299, 4
          %s301 = scalar_lea.hbm %s2, %s300
          %s302 = sshll.u32 %s301, 4
          %s303 = int_to_ptr.hbm [resolvable:$true] %s302
          %s304 = sshll.u32 %s296, 4
          %s305 = int_to_ptr.vmem [resolvable:$true] %s304
          %310 = dma.hbm_to_vmem [thread:$0]  %s303, 1024, %s305, %s293, 64, 64, 4
        $region28: #{tpu_custom_call.1} parent=15 // pred_fallthru
          _
        // Predicated region
        $region29: #{tpu_custom_call.1} parent=15 // pred_check
          %p311 = pneg %p133
        $region30: #{tpu_custom_call.1} parent=15 // pred_check_branch
          %313 = sbr.rel (%p311) target = $region32
        $region31: #{tpu_custom_call.1} parent=15 // pred_region
          %s314 = smul.u32 16, %s27
          %p315 = scmp.lt.s32.totalorder %s26, 1
          %s316 = scalar_select %p315, %s26, 1
          %p317 = scmp.lt.s32.totalorder %s314, 15
          %s318 = scalar_select %p317, %s314, 15
          %s319 = smul.addr %s316, 16
          %s320 = sadd.s32 %s318, %s319
          %s321 = smul.addr %s320, 8
          %s322 = scalar_lea.vmem %s3, %s321
          %s323 = smul.u32 16, %s27
        $region32: #{tpu_custom_call.1} parent=15 // pred_fallthru
          _
        // Predicated region
        $region33: #{tpu_custom_call.1} parent=15 // pred_check
          %p324 = pneg %p161
        $region34: #{tpu_custom_call.1} parent=15 // pred_check_branch
          %326 = sbr.rel (%p324) target = $region36
        $region35: #{tpu_custom_call.1} parent=15 // pred_region
          %s327 = smul.u32 16, %s27
          %p328 = scmp.lt.s32.totalorder %s26, 1
          %s329 = scalar_select %p328, %s26, 1
          %p330 = scmp.lt.s32.totalorder %s327, 15
          %s331 = scalar_select %p330, %s327, 15
          %s332 = smul.addr %s329, 16
          %s333 = sadd.s32 %s331, %s332
          %s334 = smul.addr %s333, 8
          %s335 = scalar_lea.vmem %s4, %s334
          %s336 = smul.u32 16, %s27
        $region36: #{tpu_custom_call.1} parent=15 // pred_fallthru
          _
        // Predicated region
        $region37: #{tpu_custom_call.1} parent=15 // pred_check
          %p337 = pneg %p187
        $region38: #{tpu_custom_call.1} parent=15 // pred_check_branch
          %339 = sbr.rel (%p337) target = $region40
        $region39: #{tpu_custom_call.1} parent=15 // pred_region
          %p340 = scmp.lt.s32.totalorder %s26, 1
          %s341 = scalar_select %p340, %s26, 1
          %s342 = scalar_lea.vmem %s5, %s341
        $region40: #{tpu_custom_call.1} parent=15 // pred_fallthru
          _
        // Predicated region
        $region41: #{tpu_custom_call.1} parent=15 // pred_check
          %p343 = pneg %p215
        $region42: #{tpu_custom_call.1} parent=15 // pred_check_branch
          %345 = sbr.rel (%p343) target = $region44
        $region43: #{tpu_custom_call.1} parent=15 // pred_region
          %s346 = smul.u32 16, %s27
          %p347 = scmp.lt.s32.totalorder %s26, 1
          %s348 = scalar_select %p347, %s26, 1
          %p349 = scmp.lt.s32.totalorder %s346, 15
          %s350 = scalar_select %p349, %s346, 15
          %s351 = smul.addr %s348, 16
          %s352 = sadd.s32 %s350, %s351
          %s353 = smul.addr %s352, 8
          %s354 = scalar_lea.vmem %s6, %s353
          %s355 = smul.u32 16, %s27
        $region44: #{tpu_custom_call.1} parent=15 // pred_fallthru
          _
      $region16: #{tpu_custom_call.1} parent=5 // pred_fallthru
        _
      %p356 = scmp.le.s32.totalorder 1, %s19
      %p357 = scmp.lt.s32.totalorder %s19, 3
      %p358 = pnand %p356, %p357
      %p359 = pneg %p358
      // Predicated region
      $region45: #{tpu_custom_call.1} parent=5 // pred_check
        _
      $region46: #{tpu_custom_call.1} parent=5 // pred_check_branch
        %361 = sbr.rel (%p358) target = $region48
      $region47: #{tpu_custom_call.1} parent=5 // pred_region
        %s362 = ssub.s32 %s19, 1
        %s363 = sand.u32 %s98, 1
        %s364 = scalar_lea.sflag [#allocation3], %s363
        %s365 = sand.u32 %s98, 1
        %s366 = smul.addr %s365, 64
        %s367 = scalar_lea.vmem [#allocation2], %s366
        // Predicated region
        $region49: #{tpu_custom_call.1} parent=47 // pred_check
          %p368 = pneg %p111
        $region50: #{tpu_custom_call.1} parent=47 // pred_check_branch
          %370 = sbr.rel (%p368) target = $region52
        $region51: #{tpu_custom_call.1} parent=47 // pred_region
          %372 = dma.done %s364, 1024
        $region52: #{tpu_custom_call.1} parent=47 // pred_fallthru
          _
        %s373 = smul.u32 16, %s29
        %p374 = scmp.lt.s32.totalorder %s28, 1
        %s375 = scalar_select %p374, %s28, 1
        %p376 = scmp.lt.s32.totalorder %s373, 15
        %s377 = scalar_select %p376, %s373, 15
        %s378 = smul.addr %s375, 16
        %s379 = sadd.s32 %s377, %s378
        %s380 = smul.addr %s379, 4
        %s381 = scalar_lea.vmem %s0, %s380
        %p382 = pneg %p59
        %p383 = pneg %p56
        %p384 = scmp.lt.s32.totalorder %s28, 1
        %s385 = scalar_select %p384, %s28, 1
        %s386 = smul.addr %s385, 16
        %s387 = smul.addr %s386, 4
        %s388 = scalar_lea.vmem %s1, %s387
        %p389 = pneg %p85
        %p390 = pneg %p82
        %s391 = sand.u32 %s98, 1
        %s392 = scalar_lea.sflag [#allocation3], %s391
        %s393 = sand.u32 %s98, 1
        %s394 = smul.addr %s393, 64
        %s395 = scalar_lea.vmem [#allocation2], %s394
        %p396 = pneg %p111
        %p397 = pneg %p108
        %s398 = smul.u32 16, %s29
        %p399 = scmp.lt.s32.totalorder %s28, 1
        %s400 = scalar_select %p399, %s28, 1
        %p401 = scmp.lt.s32.totalorder %s398, 15
        %s402 = scalar_select %p401, %s398, 15
        %s403 = smul.addr %s400, 16
        %s404 = sadd.s32 %s402, %s403
        %s405 = smul.addr %s404, 8
        %s406 = scalar_lea.vmem %s3, %s405
        %p407 = pneg %p139
        %p408 = pneg %p136
        %s409 = smul.u32 16, %s29
        %p410 = scmp.lt.s32.totalorder %s28, 1
        %s411 = scalar_select %p410, %s28, 1
        %p412 = scmp.lt.s32.totalorder %s409, 15
        %s413 = scalar_select %p412, %s409, 15
        %s414 = smul.addr %s411, 16
        %s415 = sadd.s32 %s413, %s414
        %s416 = smul.addr %s415, 8
        %s417 = scalar_lea.vmem %s4, %s416
        %p418 = pneg %p167
        %p419 = pneg %p164
        %p420 = scmp.lt.s32.totalorder %s28, 1
        %s421 = scalar_select %p420, %s28, 1
        %s422 = scalar_lea.vmem %s5, %s421
        %p423 = pneg %p193
        %p424 = pneg %p190
        %s425 = smul.u32 16, %s29
        %p426 = scmp.lt.s32.totalorder %s28, 1
        %s427 = scalar_select %p426, %s28, 1
        %p428 = scmp.lt.s32.totalorder %s425, 15
        %s429 = scalar_select %p428, %s425, 15
        %s430 = smul.addr %s427, 16
        %s431 = sadd.s32 %s429, %s430
        %s432 = smul.addr %s431, 8
        %s433 = scalar_lea.vmem %s6, %s432
        %p434 = pneg %p221
        %p435 = pneg %p218
        %p436 = pneg %p249
        %p437 = pneg %p246
        %s438 = sand.u32 %s236, 1
        %s439 = scalar_lea.sflag [#allocation4], %s438
        %s440 = sand.u32 %s236, 1
        %s441 = smul.addr %s440, 128
        %s442 = scalar_lea.vmem [#allocation5], %s441
        %s443 = smul.u32 16, %s29
        %p444 = scmp.lt.s32.totalorder %s28, 1
        %s445 = scalar_select %p444, %s28, 1
        %p446 = scmp.lt.s32.totalorder %s443, 15
        %s447 = scalar_select %p446, %s443, 15
        %s448 = smul.addr %s445, 16
        %s449 = sadd.s32 %s447, %s448
        %s450 = smul.addr %s449, 4
        %s451 = scalar_lea.vmem %s0, %s450
        %s452 = smul.u32 16, %s29
        %p453 = scmp.lt.s32.totalorder %s28, 1
        %s454 = scalar_select %p453, %s28, 1
        %s455 = smul.addr %s454, 16
        %s456 = smul.addr %s455, 4
        %s457 = scalar_lea.vmem %s1, %s456
        %s458 = smul.u32 16, %s29
        %p459 = scmp.lt.s32.totalorder %s28, 1
        %s460 = scalar_select %p459, %s28, 1
        %p461 = scmp.lt.s32.totalorder %s458, 15
        %s462 = scalar_select %p461, %s458, 15
        %s463 = smul.addr %s460, 16
        %s464 = sadd.s32 %s462, %s463
        %s465 = smul.addr %s464, 8
        %s466 = scalar_lea.vmem %s3, %s465
        %s467 = smul.u32 16, %s29
        %s468 = smul.u32 16, %s29
        %p469 = scmp.lt.s32.totalorder %s28, 1
        %s470 = scalar_select %p469, %s28, 1
        %p471 = scmp.lt.s32.totalorder %s468, 15
        %s472 = scalar_select %p471, %s468, 15
        %s473 = smul.addr %s470, 16
        %s474 = sadd.s32 %s472, %s473
        %s475 = smul.addr %s474, 8
        %s476 = scalar_lea.vmem %s4, %s475
        %s477 = smul.u32 16, %s29
        %p478 = scmp.lt.s32.totalorder %s28, 1
        %s479 = scalar_select %p478, %s28, 1
        %s480 = scalar_lea.vmem %s5, %s479
        %s481 = smul.u32 16, %s29
        %p482 = scmp.lt.s32.totalorder %s28, 1
        %s483 = scalar_select %p482, %s28, 1
        %p484 = scmp.lt.s32.totalorder %s481, 15
        %s485 = scalar_select %p484, %s481, 15
        %s486 = smul.addr %s483, 16
        %s487 = sadd.s32 %s485, %s486
        %s488 = smul.addr %s487, 8
        %s489 = scalar_lea.vmem %s6, %s488
        %s490 = smul.u32 16, %s29
        %s491 = smul.u32 16, %s29
        %v492 = vld [vmem:[%s451] sm:$0xf]
        %v493 = vld [vmem:[%s451 + $0x4] sm:$0xf]
        %v494 = vld [vmem:[%s451 + $0x8] sm:$0xf]
        %v495 = vld [vmem:[%s451 + $0xc] sm:$0xf]
        %v496 = vld [vmem:[%s451 + $0x10] sm:$0xf]
        %v497 = vld [vmem:[%s451 + $0x14] sm:$0xf]
        %v498 = vld [vmem:[%s451 + $0x18] sm:$0xf]
        %v499 = vld [vmem:[%s451 + $0x1c] sm:$0xf]
        %v500 = vld [vmem:[%s451 + $0x20] sm:$0xf]
        %v501 = vld [vmem:[%s451 + $0x24] sm:$0xf]
        %v502 = vld [vmem:[%s451 + $0x28] sm:$0xf]
        %v503 = vld [vmem:[%s451 + $0x2c] sm:$0xf]
        %v504 = vld [vmem:[%s451 + $0x30] sm:$0xf]
        %v505 = vld [vmem:[%s451 + $0x34] sm:$0xf]
        %v506 = vld [vmem:[%s451 + $0x38] sm:$0xf]
        %v507 = vld [vmem:[%s451 + $0x3c] sm:$0xf]
        %v508 = vld [vmem:[%s457] sm:$0xf]
        %v509 = vld [vmem:[%s457 + $0x4] sm:$0xf]
        %v510 = vld [vmem:[%s457 + $0x8] sm:$0xf]
        %v511 = vld [vmem:[%s457 + $0xc] sm:$0xf]
        %v512 = vld [vmem:[%s457 + $0x10] sm:$0xf]
        %v513 = vld [vmem:[%s457 + $0x14] sm:$0xf]
        %v514 = vld [vmem:[%s457 + $0x18] sm:$0xf]
        %v515 = vld [vmem:[%s457 + $0x1c] sm:$0xf]
        %v516 = vld [vmem:[%s457 + $0x20] sm:$0xf]
        %v517 = vld [vmem:[%s457 + $0x24] sm:$0xf]
        %v518 = vld [vmem:[%s457 + $0x28] sm:$0xf]
        %v519 = vld [vmem:[%s457 + $0x2c] sm:$0xf]
        %v520 = vld [vmem:[%s457 + $0x30] sm:$0xf]
        %v521 = vld [vmem:[%s457 + $0x34] sm:$0xf]
        %v522 = vld [vmem:[%s457 + $0x38] sm:$0xf]
        %v523 = vld [vmem:[%s457 + $0x3c] sm:$0xf]
        %v540 = vunpack.c.l.b16 %v492
        %v541 = vunpack.c.l.b16 %v493
        %v542 = vunpack.c.l.b16 %v494
        %v543 = vunpack.c.l.b16 %v495
        %v544 = vunpack.c.l.b16 %v496
        %v545 = vunpack.c.l.b16 %v497
        %v546 = vunpack.c.l.b16 %v498
        %v547 = vunpack.c.l.b16 %v499
        %v548 = vunpack.c.l.b16 %v500
        %v549 = vunpack.c.l.b16 %v501
        %v550 = vunpack.c.l.b16 %v502
        %v551 = vunpack.c.l.b16 %v503
        %v552 = vunpack.c.l.b16 %v504
        %v553 = vunpack.c.l.b16 %v505
        %v554 = vunpack.c.l.b16 %v506
        %v555 = vunpack.c.l.b16 %v507
        %v556 = vpack.c.b16 %v541, %v540
        %v557 = vpack.c.b16 %v543, %v542
        %v558 = vpack.c.b16 %v545, %v544
        %v559 = vpack.c.b16 %v547, %v546
        %v560 = vpack.c.b16 %v549, %v548
        %v561 = vpack.c.b16 %v551, %v550
        %v562 = vpack.c.b16 %v553, %v552
        %v563 = vpack.c.b16 %v555, %v554
        %v588 = vunpack.c.l.b16 %v508
        %v589 = vunpack.c.l.b16 %v509
        %v590 = vunpack.c.l.b16 %v510
        %v591 = vunpack.c.l.b16 %v511
        %v592 = vunpack.c.l.b16 %v512
        %v593 = vunpack.c.l.b16 %v513
        %v594 = vunpack.c.l.b16 %v514
        %v595 = vunpack.c.l.b16 %v515
        %v596 = vunpack.c.l.b16 %v516
        %v597 = vunpack.c.l.b16 %v517
        %v598 = vunpack.c.l.b16 %v518
        %v599 = vunpack.c.l.b16 %v519
        %v600 = vunpack.c.l.b16 %v520
        %v601 = vunpack.c.l.b16 %v521
        %v602 = vunpack.c.l.b16 %v522
        %v603 = vunpack.c.l.b16 %v523
        %v604 = vpack.c.b16 %v589, %v588
        %v605 = vpack.c.b16 %v591, %v590
        %v606 = vpack.c.b16 %v593, %v592
        %v607 = vpack.c.b16 %v595, %v594
        %v608 = vpack.c.b16 %v597, %v596
        %v609 = vpack.c.b16 %v599, %v598
        %v610 = vpack.c.b16 %v601, %v600
        %v611 = vpack.c.b16 %v603, %v602
        %620 = vmatpush.bf16.msra.mxu0 %v611
        %621 = vmatpush.bf16.msra.mxu0 %v610
        %622 = vmatpush.bf16.msra.mxu0 %v609
        %623 = vmatpush.bf16.msra.mxu0 %v608
        %624 = vmatpush.bf16.msra.mxu0 %v607
        %625 = vmatpush.bf16.msra.mxu0 %v606
        %626 = vmatpush.bf16.msra.mxu0 %v605
        %627 = vmatpush.bf16.msra.mxu0 %v604
        %628 = vmatmul.bf16.gmra.mxu0 %v556
        %v629 = vpop.f32.mrf.mxu0
        %v630 = vadd.f32 0.0, %v629
        %v631 = vpop.f32.mrf.mxu0
        %v632 = vadd.f32 0.0, %v631
        %633 = vmatmul.bf16.gmra.mxu0 %v557
        %v634 = vpop.f32.mrf.mxu0
        %v635 = vadd.f32 0.0, %v634
        %v636 = vpop.f32.mrf.mxu0
        %v637 = vadd.f32 0.0, %v636
        %638 = vmatmul.bf16.gmra.mxu0 %v558
        %v639 = vpop.f32.mrf.mxu0
        %v640 = vadd.f32 0.0, %v639
        %v641 = vpop.f32.mrf.mxu0
        %v642 = vadd.f32 0.0, %v641
        %643 = vmatmul.bf16.gmra.mxu0 %v559
        %v644 = vpop.f32.mrf.mxu0
        %v645 = vadd.f32 0.0, %v644
        %v646 = vpop.f32.mrf.mxu0
        %v647 = vadd.f32 0.0, %v646
        %648 = vmatmul.bf16.gmra.mxu0 %v560
        %v649 = vpop.f32.mrf.mxu0
        %v650 = vadd.f32 0.0, %v649
        %v651 = vpop.f32.mrf.mxu0
        %v652 = vadd.f32 0.0, %v651
        %653 = vmatmul.bf16.gmra.mxu0 %v561
        %v654 = vpop.f32.mrf.mxu0
        %v655 = vadd.f32 0.0, %v654
        %v656 = vpop.f32.mrf.mxu0
        %v657 = vadd.f32 0.0, %v656
        %658 = vmatmul.bf16.gmra.mxu0 %v562
        %v659 = vpop.f32.mrf.mxu0
        %v660 = vadd.f32 0.0, %v659
        %v661 = vpop.f32.mrf.mxu0
        %v662 = vadd.f32 0.0, %v661
        %663 = vmatmul.bf16.gmra.mxu0 %v563
        %v664 = vpop.f32.mrf.mxu0
        %v665 = vadd.f32 0.0, %v664
        %v666 = vpop.f32.mrf.mxu0
        %v667 = vadd.f32 0.0, %v666
        %668 = vdwg.mxu0
        %v669 = vld [vmem:[%s476] sm:$0xff]
        %v670 = vld [vmem:[%s476 + $0x8] sm:$0xff]
        %v671 = vld [vmem:[%s476 + $0x10] sm:$0xff]
        %v672 = vld [vmem:[%s476 + $0x18] sm:$0xff]
        %v673 = vld [vmem:[%s476 + $0x20] sm:$0xff]
        %v674 = vld [vmem:[%s476 + $0x28] sm:$0xff]
        %v675 = vld [vmem:[%s476 + $0x30] sm:$0xff]
        %v676 = vld [vmem:[%s476 + $0x38] sm:$0xff]
        %v677 = vld [vmem:[%s476 + $0x40] sm:$0xff]
        %v678 = vld [vmem:[%s476 + $0x48] sm:$0xff]
        %v679 = vld [vmem:[%s476 + $0x50] sm:$0xff]
        %v680 = vld [vmem:[%s476 + $0x58] sm:$0xff]
        %v681 = vld [vmem:[%s476 + $0x60] sm:$0xff]
        %v682 = vld [vmem:[%s476 + $0x68] sm:$0xff]
        %v683 = vld [vmem:[%s476 + $0x70] sm:$0xff]
        %v684 = vld [vmem:[%s476 + $0x78] sm:$0xff]
        %v685 = vld [vmem:[%s480] sm:$0x1]
        %686 = vset.pattern.permute.xlu0 0
        %687 = vperm.xlu0 %686, %v669
        %v688 = vpop.permute.xlu0 %687
        %689 = vset.pattern.permute.xlu0 0
        %690 = vperm.xlu0 %689, %v670
        %v691 = vpop.permute.xlu0 %690
        %692 = vset.pattern.permute.xlu0 0
        %693 = vperm.xlu0 %692, %v671
        %v694 = vpop.permute.xlu0 %693
        %695 = vset.pattern.permute.xlu0 0
        %696 = vperm.xlu0 %695, %v672
        %v697 = vpop.permute.xlu0 %696
        %698 = vset.pattern.permute.xlu0 0
        %699 = vperm.xlu0 %698, %v673
        %v700 = vpop.permute.xlu0 %699
        %701 = vset.pattern.permute.xlu0 0
        %702 = vperm.xlu0 %701, %v674
        %v703 = vpop.permute.xlu0 %702
        %704 = vset.pattern.permute.xlu0 0
        %705 = vperm.xlu0 %704, %v675
        %v706 = vpop.permute.xlu0 %705
        %707 = vset.pattern.permute.xlu0 0
        %708 = vperm.xlu0 %707, %v676
        %v709 = vpop.permute.xlu0 %708
        %710 = vset.pattern.permute.xlu0 0
        %711 = vperm.xlu0 %710, %v677
        %v712 = vpop.permute.xlu0 %711
        %713 = vset.pattern.permute.xlu0 0
        %714 = vperm.xlu0 %713, %v678
        %v715 = vpop.permute.xlu0 %714
        %716 = vset.pattern.permute.xlu0 0
        %717 = vperm.xlu0 %716, %v679
        %v718 = vpop.permute.xlu0 %717
        %719 = vset.pattern.permute.xlu0 0
        %720 = vperm.xlu0 %719, %v680
        %v721 = vpop.permute.xlu0 %720
        %722 = vset.pattern.permute.xlu0 0
        %723 = vperm.xlu0 %722, %v681
        %v724 = vpop.permute.xlu0 %723
        %725 = vset.pattern.permute.xlu0 0
        %726 = vperm.xlu0 %725, %v682
        %v727 = vpop.permute.xlu0 %726
        %728 = vset.pattern.permute.xlu0 0
        %729 = vperm.xlu0 %728, %v683
        %v730 = vpop.permute.xlu0 %729
        %731 = vset.pattern.permute.xlu0 0
        %732 = vperm.xlu0 %731, %v684
        %v733 = vpop.permute.xlu0 %732
        %v734 = vperm.slane %v685, 0
        %vm735 = vcmp.eq.s32.totalorder %v688, %v734
        %vm736 = vcmp.eq.s32.totalorder %v691, %v734
        %vm737 = vcmp.eq.s32.totalorder %v694, %v734
        %vm738 = vcmp.eq.s32.totalorder %v697, %v734
        %vm739 = vcmp.eq.s32.totalorder %v700, %v734
        %vm740 = vcmp.eq.s32.totalorder %v703, %v734
        %vm741 = vcmp.eq.s32.totalorder %v706, %v734
        %vm742 = vcmp.eq.s32.totalorder %v709, %v734
        %vm743 = vcmp.eq.s32.totalorder %v712, %v734
        %vm744 = vcmp.eq.s32.totalorder %v715, %v734
        %vm745 = vcmp.eq.s32.totalorder %v718, %v734
        %vm746 = vcmp.eq.s32.totalorder %v721, %v734
        %vm747 = vcmp.eq.s32.totalorder %v724, %v734
        %vm748 = vcmp.eq.s32.totalorder %v727, %v734
        %vm749 = vcmp.eq.s32.totalorder %v730, %v734
        %vm750 = vcmp.eq.s32.totalorder %v733, %v734
        %v751 = vsel %vm735, %v630, -1e+30
        %v752 = vsel %vm736, %v632, -1e+30
        %v753 = vsel %vm737, %v635, -1e+30
        %v754 = vsel %vm738, %v637, -1e+30
        %v755 = vsel %vm739, %v640, -1e+30
        %v756 = vsel %vm740, %v642, -1e+30
        %v757 = vsel %vm741, %v645, -1e+30
        %v758 = vsel %vm742, %v647, -1e+30
        %v759 = vsel %vm743, %v650, -1e+30
        %v760 = vsel %vm744, %v652, -1e+30
        %v761 = vsel %vm745, %v655, -1e+30
        %v762 = vsel %vm746, %v657, -1e+30
        %v763 = vsel %vm747, %v660, -1e+30
        %v764 = vsel %vm748, %v662, -1e+30
        %v765 = vsel %vm749, %v665, -1e+30
        %v766 = vsel %vm750, %v667, -1e+30
        %767 = vmax.xlane.f32.xlu0 %v751
        %v768 = vpop.xlane.xlu0 %767
        %769 = vmax.xlane.f32.xlu0 %v752
        %v770 = vpop.xlane.xlu0 %769
        %771 = vmax.xlane.f32.xlu0 %v753
        %v772 = vpop.xlane.xlu0 %771
        %773 = vmax.xlane.f32.xlu0 %v754
        %v774 = vpop.xlane.xlu0 %773
        %775 = vmax.xlane.f32.xlu0 %v755
        %v776 = vpop.xlane.xlu0 %775
        %777 = vmax.xlane.f32.xlu0 %v756
        %v778 = vpop.xlane.xlu0 %777
        %779 = vmax.xlane.f32.xlu0 %v757
        %v780 = vpop.xlane.xlu0 %779
        %781 = vmax.xlane.f32.xlu0 %v758
        %v782 = vpop.xlane.xlu0 %781
        %783 = vmax.xlane.f32.xlu0 %v759
        %v784 = vpop.xlane.xlu0 %783
        %785 = vmax.xlane.f32.xlu0 %v760
        %v786 = vpop.xlane.xlu0 %785
        %787 = vmax.xlane.f32.xlu0 %v761
        %v788 = vpop.xlane.xlu0 %787
        %789 = vmax.xlane.f32.xlu0 %v762
        %v790 = vpop.xlane.xlu0 %789
        %791 = vmax.xlane.f32.xlu0 %v763
        %v792 = vpop.xlane.xlu0 %791
        %793 = vmax.xlane.f32.xlu0 %v764
        %v794 = vpop.xlane.xlu0 %793
        %795 = vmax.xlane.f32.xlu0 %v765
        %v796 = vpop.xlane.xlu0 %795
        %797 = vmax.xlane.f32.xlu0 %v766
        %v798 = vpop.xlane.xlu0 %797
        %v799 = vsub.f32 %v751, %v768
        %v800 = vsub.f32 %v752, %v770
        %v801 = vsub.f32 %v753, %v772
        %v802 = vsub.f32 %v754, %v774
        %v803 = vsub.f32 %v755, %v776
        %v804 = vsub.f32 %v756, %v778
        %v805 = vsub.f32 %v757, %v780
        %v806 = vsub.f32 %v758, %v782
        %v807 = vsub.f32 %v759, %v784
        %v808 = vsub.f32 %v760, %v786
        %v809 = vsub.f32 %v761, %v788
        %v810 = vsub.f32 %v762, %v790
        %v811 = vsub.f32 %v763, %v792
        %v812 = vsub.f32 %v764, %v794
        %v813 = vsub.f32 %v765, %v796
        %v814 = vsub.f32 %v766, %v798
        %v815 = vmul.f32 %v799, 1.442695
        %v816 = vpow.pop %v815
        %v817 = vmul.f32 %v800, 1.442695
        %v818 = vpow.pop %v817
        %v819 = vmul.f32 %v801, 1.442695
        %v820 = vpow.pop %v819
        %v821 = vmul.f32 %v802, 1.442695
        %v822 = vpow.pop %v821
        %v823 = vmul.f32 %v803, 1.442695
        %v824 = vpow.pop %v823
        %v825 = vmul.f32 %v804, 1.442695
        %v826 = vpow.pop %v825
        %v827 = vmul.f32 %v805, 1.442695
        %v828 = vpow.pop %v827
        %v829 = vmul.f32 %v806, 1.442695
        %v830 = vpow.pop %v829
        %v831 = vmul.f32 %v807, 1.442695
        %v832 = vpow.pop %v831
        %v833 = vmul.f32 %v808, 1.442695
        %v834 = vpow.pop %v833
        %v835 = vmul.f32 %v809, 1.442695
        %v836 = vpow.pop %v835
        %v837 = vmul.f32 %v810, 1.442695
        %v838 = vpow.pop %v837
        %v839 = vmul.f32 %v811, 1.442695
        %v840 = vpow.pop %v839
        %v841 = vmul.f32 %v812, 1.442695
        %v842 = vpow.pop %v841
        %v843 = vmul.f32 %v813, 1.442695
        %v844 = vpow.pop %v843
        %v845 = vmul.f32 %v814, 1.442695
        %v846 = vpow.pop %v845
        %847 = vadd.xlane.f32.xlu0 %v816
        %v848 = vpop.xlane.xlu0 %847
        %849 = vadd.xlane.f32.xlu0 %v818
        %v850 = vpop.xlane.xlu0 %849
        %851 = vadd.xlane.f32.xlu0 %v820
        %v852 = vpop.xlane.xlu0 %851
        %853 = vadd.xlane.f32.xlu0 %v822
        %v854 = vpop.xlane.xlu0 %853
        %855 = vadd.xlane.f32.xlu0 %v824
        %v856 = vpop.xlane.xlu0 %855
        %857 = vadd.xlane.f32.xlu0 %v826
        %v858 = vpop.xlane.xlu0 %857
        %859 = vadd.xlane.f32.xlu0 %v828
        %v860 = vpop.xlane.xlu0 %859
        %861 = vadd.xlane.f32.xlu0 %v830
        %v862 = vpop.xlane.xlu0 %861
        %863 = vadd.xlane.f32.xlu0 %v832
        %v864 = vpop.xlane.xlu0 %863
        %865 = vadd.xlane.f32.xlu0 %v834
        %v866 = vpop.xlane.xlu0 %865
        %867 = vadd.xlane.f32.xlu0 %v836
        %v868 = vpop.xlane.xlu0 %867
        %869 = vadd.xlane.f32.xlu0 %v838
        %v870 = vpop.xlane.xlu0 %869
        %871 = vadd.xlane.f32.xlu0 %v840
        %v872 = vpop.xlane.xlu0 %871
        %873 = vadd.xlane.f32.xlu0 %v842
        %v874 = vpop.xlane.xlu0 %873
        %875 = vadd.xlane.f32.xlu0 %v844
        %v876 = vpop.xlane.xlu0 %875
        %877 = vadd.xlane.f32.xlu0 %v846
        %v878 = vpop.xlane.xlu0 %877
        %v879 = vrcp.pop %v848
        %v880 = vrcp.pop %v850
        %v881 = vrcp.pop %v852
        %v882 = vrcp.pop %v854
        %v883 = vrcp.pop %v856
        %v884 = vrcp.pop %v858
        %v885 = vrcp.pop %v860
        %v886 = vrcp.pop %v862
        %v887 = vrcp.pop %v864
        %v888 = vrcp.pop %v866
        %v889 = vrcp.pop %v868
        %v890 = vrcp.pop %v870
        %v891 = vrcp.pop %v872
        %v892 = vrcp.pop %v874
        %v893 = vrcp.pop %v876
        %v894 = vrcp.pop %v878
        %v895 = vmul.f32 %v816, %v879
        %v896 = vmul.f32 %v818, %v880
        %v897 = vmul.f32 %v820, %v881
        %v898 = vmul.f32 %v822, %v882
        %v899 = vmul.f32 %v824, %v883
        %v900 = vmul.f32 %v826, %v884
        %v901 = vmul.f32 %v828, %v885
        %v902 = vmul.f32 %v830, %v886
        %v903 = vmul.f32 %v832, %v887
        %v904 = vmul.f32 %v834, %v888
        %v905 = vmul.f32 %v836, %v889
        %v906 = vmul.f32 %v838, %v890
        %v907 = vmul.f32 %v840, %v891
        %v908 = vmul.f32 %v842, %v892
        %v909 = vmul.f32 %v844, %v893
        %v910 = vmul.f32 %v846, %v894
        %v911 = vpack.c.bf16 %v896, %v895
        %v912 = vpack.c.bf16 %v898, %v897
        %v913 = vpack.c.bf16 %v900, %v899
        %v914 = vpack.c.bf16 %v902, %v901
        %v915 = vpack.c.bf16 %v904, %v903
        %v916 = vpack.c.bf16 %v906, %v905
        %v917 = vpack.c.bf16 %v908, %v907
        %v918 = vpack.c.bf16 %v910, %v909
        %v919 = vld [vmem:[%s367] sm:$0xf]
        %v920 = vld [vmem:[%s367 + $0x4] sm:$0xf]
        %v921 = vld [vmem:[%s367 + $0x8] sm:$0xf]
        %v922 = vld [vmem:[%s367 + $0xc] sm:$0xf]
        %v923 = vld [vmem:[%s367 + $0x10] sm:$0xf]
        %v924 = vld [vmem:[%s367 + $0x14] sm:$0xf]
        %v925 = vld [vmem:[%s367 + $0x18] sm:$0xf]
        %v926 = vld [vmem:[%s367 + $0x1c] sm:$0xf]
        %v927 = vld [vmem:[%s367 + $0x20] sm:$0xf]
        %v928 = vld [vmem:[%s367 + $0x24] sm:$0xf]
        %v929 = vld [vmem:[%s367 + $0x28] sm:$0xf]
        %v930 = vld [vmem:[%s367 + $0x2c] sm:$0xf]
        %v931 = vld [vmem:[%s367 + $0x30] sm:$0xf]
        %v932 = vld [vmem:[%s367 + $0x34] sm:$0xf]
        %v933 = vld [vmem:[%s367 + $0x38] sm:$0xf]
        %v934 = vld [vmem:[%s367 + $0x3c] sm:$0xf]
        %v951 = vunpack.c.l.b16 %v919
        %v952 = vunpack.c.l.b16 %v920
        %v953 = vunpack.c.l.b16 %v921
        %v954 = vunpack.c.l.b16 %v922
        %v955 = vunpack.c.l.b16 %v923
        %v956 = vunpack.c.l.b16 %v924
        %v957 = vunpack.c.l.b16 %v925
        %v958 = vunpack.c.l.b16 %v926
        %v959 = vunpack.c.l.b16 %v927
        %v960 = vunpack.c.l.b16 %v928
        %v961 = vunpack.c.l.b16 %v929
        %v962 = vunpack.c.l.b16 %v930
        %v963 = vunpack.c.l.b16 %v931
        %v964 = vunpack.c.l.b16 %v932
        %v965 = vunpack.c.l.b16 %v933
        %v966 = vunpack.c.l.b16 %v934
        %v967 = vpack.c.b16 %v952, %v951
        %v968 = vpack.c.b16 %v954, %v953
        %v969 = vpack.c.b16 %v956, %v955
        %v970 = vpack.c.b16 %v958, %v957
        %v971 = vpack.c.b16 %v960, %v959
        %v972 = vpack.c.b16 %v962, %v961
        %v973 = vpack.c.b16 %v964, %v963
        %v974 = vpack.c.b16 %v966, %v965
        %983 = vmatpush.bf16.msra.mxu0 %v974
        %984 = vmatpush.bf16.msra.mxu0 %v973
        %985 = vmatpush.bf16.msra.mxu0 %v972
        %986 = vmatpush.bf16.msra.mxu0 %v971
        %987 = vmatpush.bf16.msra.mxu0 %v970
        %988 = vmatpush.bf16.msra.mxu0 %v969
        %989 = vmatpush.bf16.msra.mxu0 %v968
        %990 = vmatpush.bf16.msra.mxu0 %v967
        %991 = vmatmul.bf16.gmra.mxu0 %v911
        %v992 = vpop.f32.mrf.mxu0
        %v993 = vadd.f32 0.0, %v992
        %v994 = vpop.f32.mrf.mxu0
        %v995 = vadd.f32 0.0, %v994
        %996 = vmatmul.bf16.gmra.mxu0 %v912
        %v997 = vpop.f32.mrf.mxu0
        %v998 = vadd.f32 0.0, %v997
        %v999 = vpop.f32.mrf.mxu0
        %v1000 = vadd.f32 0.0, %v999
        %1001 = vmatmul.bf16.gmra.mxu0 %v913
        %v1002 = vpop.f32.mrf.mxu0
        %v1003 = vadd.f32 0.0, %v1002
        %v1004 = vpop.f32.mrf.mxu0
        %v1005 = vadd.f32 0.0, %v1004
        %1006 = vmatmul.bf16.gmra.mxu0 %v914
        %v1007 = vpop.f32.mrf.mxu0
        %v1008 = vadd.f32 0.0, %v1007
        %v1009 = vpop.f32.mrf.mxu0
        %v1010 = vadd.f32 0.0, %v1009
        %1011 = vmatmul.bf16.gmra.mxu0 %v915
        %v1012 = vpop.f32.mrf.mxu0
        %v1013 = vadd.f32 0.0, %v1012
        %v1014 = vpop.f32.mrf.mxu0
        %v1015 = vadd.f32 0.0, %v1014
        %1016 = vmatmul.bf16.gmra.mxu0 %v916
        %v1017 = vpop.f32.mrf.mxu0
        %v1018 = vadd.f32 0.0, %v1017
        %v1019 = vpop.f32.mrf.mxu0
        %v1020 = vadd.f32 0.0, %v1019
        %1021 = vmatmul.bf16.gmra.mxu0 %v917
        %v1022 = vpop.f32.mrf.mxu0
        %v1023 = vadd.f32 0.0, %v1022
        %v1024 = vpop.f32.mrf.mxu0
        %v1025 = vadd.f32 0.0, %v1024
        %1026 = vmatmul.bf16.gmra.mxu0 %v918
        %v1027 = vpop.f32.mrf.mxu0
        %v1028 = vadd.f32 0.0, %v1027
        %v1029 = vpop.f32.mrf.mxu0
        %v1030 = vadd.f32 0.0, %v1029
        %1031 = vdwg.mxu0
        %v1032 = vld [vmem:[%s489] sm:$0xff]
        %v1033 = vld [vmem:[%s489 + $0x8] sm:$0xff]
        %v1034 = vld [vmem:[%s489 + $0x10] sm:$0xff]
        %v1035 = vld [vmem:[%s489 + $0x18] sm:$0xff]
        %v1036 = vld [vmem:[%s489 + $0x20] sm:$0xff]
        %v1037 = vld [vmem:[%s489 + $0x28] sm:$0xff]
        %v1038 = vld [vmem:[%s489 + $0x30] sm:$0xff]
        %v1039 = vld [vmem:[%s489 + $0x38] sm:$0xff]
        %v1040 = vld [vmem:[%s489 + $0x40] sm:$0xff]
        %v1041 = vld [vmem:[%s489 + $0x48] sm:$0xff]
        %v1042 = vld [vmem:[%s489 + $0x50] sm:$0xff]
        %v1043 = vld [vmem:[%s489 + $0x58] sm:$0xff]
        %v1044 = vld [vmem:[%s489 + $0x60] sm:$0xff]
        %v1045 = vld [vmem:[%s489 + $0x68] sm:$0xff]
        %v1046 = vld [vmem:[%s489 + $0x70] sm:$0xff]
        %v1047 = vld [vmem:[%s489 + $0x78] sm:$0xff]
        %vm1048 = vcmp.eq.s32.totalorder %v1032, 1
        %vm1049 = vcmp.eq.s32.totalorder %v1033, 1
        %vm1050 = vcmp.eq.s32.totalorder %v1034, 1
        %vm1051 = vcmp.eq.s32.totalorder %v1035, 1
        %vm1052 = vcmp.eq.s32.totalorder %v1036, 1
        %vm1053 = vcmp.eq.s32.totalorder %v1037, 1
        %vm1054 = vcmp.eq.s32.totalorder %v1038, 1
        %vm1055 = vcmp.eq.s32.totalorder %v1039, 1
        %vm1056 = vcmp.eq.s32.totalorder %v1040, 1
        %vm1057 = vcmp.eq.s32.totalorder %v1041, 1
        %vm1058 = vcmp.eq.s32.totalorder %v1042, 1
        %vm1059 = vcmp.eq.s32.totalorder %v1043, 1
        %vm1060 = vcmp.eq.s32.totalorder %v1044, 1
        %vm1061 = vcmp.eq.s32.totalorder %v1045, 1
        %vm1062 = vcmp.eq.s32.totalorder %v1046, 1
        %vm1063 = vcmp.eq.s32.totalorder %v1047, 1
        %v1064 = vld [vmem:[%s466] sm:$0xff]
        %v1065 = vld [vmem:[%s466 + $0x8] sm:$0xff]
        %v1066 = vld [vmem:[%s466 + $0x10] sm:$0xff]
        %v1067 = vld [vmem:[%s466 + $0x18] sm:$0xff]
        %v1068 = vld [vmem:[%s466 + $0x20] sm:$0xff]
        %v1069 = vld [vmem:[%s466 + $0x28] sm:$0xff]
        %v1070 = vld [vmem:[%s466 + $0x30] sm:$0xff]
        %v1071 = vld [vmem:[%s466 + $0x38] sm:$0xff]
        %v1072 = vld [vmem:[%s466 + $0x40] sm:$0xff]
        %v1073 = vld [vmem:[%s466 + $0x48] sm:$0xff]
        %v1074 = vld [vmem:[%s466 + $0x50] sm:$0xff]
        %v1075 = vld [vmem:[%s466 + $0x58] sm:$0xff]
        %v1076 = vld [vmem:[%s466 + $0x60] sm:$0xff]
        %v1077 = vld [vmem:[%s466 + $0x68] sm:$0xff]
        %v1078 = vld [vmem:[%s466 + $0x70] sm:$0xff]
        %v1079 = vld [vmem:[%s466 + $0x78] sm:$0xff]
        %v1080 = vsel %vm1048, 1, 0
        %v1081 = vsel %vm1049, 1, 0
        %v1082 = vsel %vm1050, 1, 0
        %v1083 = vsel %vm1051, 1, 0
        %v1084 = vsel %vm1052, 1, 0
        %v1085 = vsel %vm1053, 1, 0
        %v1086 = vsel %vm1054, 1, 0
        %v1087 = vsel %vm1055, 1, 0
        %v1088 = vsel %vm1056, 1, 0
        %v1089 = vsel %vm1057, 1, 0
        %v1090 = vsel %vm1058, 1, 0
        %v1091 = vsel %vm1059, 1, 0
        %v1092 = vsel %vm1060, 1, 0
        %v1093 = vsel %vm1061, 1, 0
        %v1094 = vsel %vm1062, 1, 0
        %v1095 = vsel %vm1063, 1, 0
        %1096 = vset.pattern.permute.xlu0 0
        %1097 = vperm.xlu0 %1096, %v1080
        %v1098 = vpop.permute.xlu0 %1097
        %1099 = vset.pattern.permute.xlu0 0
        %1100 = vperm.xlu0 %1099, %v1081
        %v1101 = vpop.permute.xlu0 %1100
        %1102 = vset.pattern.permute.xlu0 0
        %1103 = vperm.xlu0 %1102, %v1082
        %v1104 = vpop.permute.xlu0 %1103
        %1105 = vset.pattern.permute.xlu0 0
        %1106 = vperm.xlu0 %1105, %v1083
        %v1107 = vpop.permute.xlu0 %1106
        %1108 = vset.pattern.permute.xlu0 0
        %1109 = vperm.xlu0 %1108, %v1084
        %v1110 = vpop.permute.xlu0 %1109
        %1111 = vset.pattern.permute.xlu0 0
        %1112 = vperm.xlu0 %1111, %v1085
        %v1113 = vpop.permute.xlu0 %1112
        %1114 = vset.pattern.permute.xlu0 0
        %1115 = vperm.xlu0 %1114, %v1086
        %v1116 = vpop.permute.xlu0 %1115
        %1117 = vset.pattern.permute.xlu0 0
        %1118 = vperm.xlu0 %1117, %v1087
        %v1119 = vpop.permute.xlu0 %1118
        %1120 = vset.pattern.permute.xlu0 0
        %1121 = vperm.xlu0 %1120, %v1088
        %v1122 = vpop.permute.xlu0 %1121
        %1123 = vset.pattern.permute.xlu0 0
        %1124 = vperm.xlu0 %1123, %v1089
        %v1125 = vpop.permute.xlu0 %1124
        %1126 = vset.pattern.permute.xlu0 0
        %1127 = vperm.xlu0 %1126, %v1090
        %v1128 = vpop.permute.xlu0 %1127
        %1129 = vset.pattern.permute.xlu0 0
        %1130 = vperm.xlu0 %1129, %v1091
        %v1131 = vpop.permute.xlu0 %1130
        %1132 = vset.pattern.permute.xlu0 0
        %1133 = vperm.xlu0 %1132, %v1092
        %v1134 = vpop.permute.xlu0 %1133
        %1135 = vset.pattern.permute.xlu0 0
        %1136 = vperm.xlu0 %1135, %v1093
        %v1137 = vpop.permute.xlu0 %1136
        %1138 = vset.pattern.permute.xlu0 0
        %1139 = vperm.xlu0 %1138, %v1094
        %v1140 = vpop.permute.xlu0 %1139
        %1141 = vset.pattern.permute.xlu0 0
        %1142 = vperm.xlu0 %1141, %v1095
        %v1143 = vpop.permute.xlu0 %1142
        %vm1144 = vcmp.eq.s32.totalorder %v1098, 1
        %vm1145 = vcmp.eq.s32.totalorder %v1101, 1
        %vm1146 = vcmp.eq.s32.totalorder %v1104, 1
        %vm1147 = vcmp.eq.s32.totalorder %v1107, 1
        %vm1148 = vcmp.eq.s32.totalorder %v1110, 1
        %vm1149 = vcmp.eq.s32.totalorder %v1113, 1
        %vm1150 = vcmp.eq.s32.totalorder %v1116, 1
        %vm1151 = vcmp.eq.s32.totalorder %v1119, 1
        %vm1152 = vcmp.eq.s32.totalorder %v1122, 1
        %vm1153 = vcmp.eq.s32.totalorder %v1125, 1
        %vm1154 = vcmp.eq.s32.totalorder %v1128, 1
        %vm1155 = vcmp.eq.s32.totalorder %v1131, 1
        %vm1156 = vcmp.eq.s32.totalorder %v1134, 1
        %vm1157 = vcmp.eq.s32.totalorder %v1137, 1
        %vm1158 = vcmp.eq.s32.totalorder %v1140, 1
        %vm1159 = vcmp.eq.s32.totalorder %v1143, 1
        %v1160 = vsel %vm1144, %v993, %v1064
        %v1161 = vsel %vm1145, %v995, %v1065
        %v1162 = vsel %vm1146, %v998, %v1066
        %v1163 = vsel %vm1147, %v1000, %v1067
        %v1164 = vsel %vm1148, %v1003, %v1068
        %v1165 = vsel %vm1149, %v1005, %v1069
        %v1166 = vsel %vm1150, %v1008, %v1070
        %v1167 = vsel %vm1151, %v1010, %v1071
        %v1168 = vsel %vm1152, %v1013, %v1072
        %v1169 = vsel %vm1153, %v1015, %v1073
        %v1170 = vsel %vm1154, %v1018, %v1074
        %v1171 = vsel %vm1155, %v1020, %v1075
        %v1172 = vsel %vm1156, %v1023, %v1076
        %v1173 = vsel %vm1157, %v1025, %v1077
        %v1174 = vsel %vm1158, %v1028, %v1078
        %v1175 = vsel %vm1159, %v1030, %v1079
        %1176 = vst [vmem:[%s442] sm:$0xff] %v1160
        %1177 = vst [vmem:[%s442 + $0x8] sm:$0xff] %v1161
        %1178 = vst [vmem:[%s442 + $0x10] sm:$0xff] %v1162
        %1179 = vst [vmem:[%s442 + $0x18] sm:$0xff] %v1163
        %1180 = vst [vmem:[%s442 + $0x20] sm:$0xff] %v1164
        %1181 = vst [vmem:[%s442 + $0x28] sm:$0xff] %v1165
        %1182 = vst [vmem:[%s442 + $0x30] sm:$0xff] %v1166
        %1183 = vst [vmem:[%s442 + $0x38] sm:$0xff] %v1167
        %1184 = vst [vmem:[%s442 + $0x40] sm:$0xff] %v1168
        %1185 = vst [vmem:[%s442 + $0x48] sm:$0xff] %v1169
        %1186 = vst [vmem:[%s442 + $0x50] sm:$0xff] %v1170
        %1187 = vst [vmem:[%s442 + $0x58] sm:$0xff] %v1171
        %1188 = vst [vmem:[%s442 + $0x60] sm:$0xff] %v1172
        %1189 = vst [vmem:[%s442 + $0x68] sm:$0xff] %v1173
        %1190 = vst [vmem:[%s442 + $0x70] sm:$0xff] %v1174
        %1191 = vst [vmem:[%s442 + $0x78] sm:$0xff] %v1175
        %s1192 = sand.u32 %s236, 1
        %s1193 = scalar_lea.sflag [#allocation4], %s1192
        %s1194 = sand.u32 %s236, 1
        %s1195 = smul.addr %s1194, 128
        %s1196 = scalar_lea.vmem [#allocation5], %s1195
        // Predicated region
        $region53: #{tpu_custom_call.1} parent=47 // pred_check
          %p1197 = pneg %p246
        $region54: #{tpu_custom_call.1} parent=47 // pred_check_branch
          %1199 = sbr.rel (%p1197) target = $region56
        $region55: #{tpu_custom_call.1} parent=47 // pred_region
          %s1200 = smul.u32 16, %s29
          %1202 = vsyncadd %s1193, 0
          %s1203 = smul.addr %s28, 16
          %s1204 = sadd.s32 %s1200, %s1203
          %s1205 = smul.addr %s1204, 8
          %s1206 = scalar_lea.hbm %s7, %s1205
          %s1207 = sshll.u32 %s1196, 4
          %s1208 = int_to_ptr.vmem [resolvable:$true] %s1207
          %s1209 = sshll.u32 %s1206, 4
          %s1210 = int_to_ptr.hbm [resolvable:$true] %s1209
          %1215 = dma.vmem_to_hbm [thread:$0]  %s1208, 2048, %s1210, %s1193, 128, 128, 8
        $region56: #{tpu_custom_call.1} parent=47 // pred_fallthru
          _
      $region48: #{tpu_custom_call.1} parent=5 // pred_fallthru
        _
      %p1216 = scmp.le.s32.totalorder 2, %s19
      // Predicated region
      $region57: #{tpu_custom_call.1} parent=5 // pred_check
        %p1217 = pneg %p1216
      $region58: #{tpu_custom_call.1} parent=5 // pred_check_branch
        %1219 = sbr.rel (%p1217) target = $region60
      $region59: #{tpu_custom_call.1} parent=5 // pred_region
        %s1220 = ssub.s32 %s19, 2
        // Predicated region
        $region61: #{tpu_custom_call.1} parent=59 // pred_check
          %p1221 = pneg %p252
        $region62: #{tpu_custom_call.1} parent=59 // pred_check_branch
          %1223 = sbr.rel (%p1221) target = $region64
        $region63: #{tpu_custom_call.1} parent=59 // pred_region
          %s1224 = sand.u32 %s237, 1
          %s1225 = scalar_lea.sflag [#allocation4], %s1224
          %s1226 = sand.u32 %s237, 1
          %s1227 = smul.addr %s1226, 128
          %s1228 = scalar_lea.vmem [#allocation5], %s1227
          %1230 = dma.done %s1225, 2048
        $region64: #{tpu_custom_call.1} parent=59 // pred_fallthru
          _
      $region60: #{tpu_custom_call.1} parent=5 // pred_fallthru
        _
    $region6: #{tpu_custom_call.1} parent=1 // loop_footer
      %s23 = sadd.s32 1, %s19
    $region7: #{tpu_custom_call.1} parent=1 // loop_footer_branch
      %18 = sbr.rel target = $region3
    $region8: #{tpu_custom_call.1} parent=1 // loop_exit
      _
    %1231 = vsyncpa [#allocation3], 1
    %s1232 = scalar_lea.sflag [#allocation3], 1
    %1233 = vsyncpa %s1232, 1
    %1234 = vsyncpa [#allocation4], 1
    %s1235 = scalar_lea.sflag [#allocation4], 1
    %1236 = vsyncpa %s1235, 1

</llo_original>
